<compile_context>
chip_gen: v7x
topology: tpu7x:2x2x1
jax: 0.10.0
libtpu: 0.0.40
codegen_flags: <defaults>
</compile_context>

<pallas_src>
import jax
import jax.numpy as jnp
from jax.experimental import pallas as pl
from jax.experimental.pallas import tpu as pltpu

_LANES = 128
_TARGET_BLOCK_BYTES = 4 * 1024 * 1024  # ~4 MiB blocks: safe on all generations


def _copy_kernel(x_ref, o_ref):
    # Straight copy of the current lane-dense (block_rows, W) tile.
    o_ref[...] = x_ref[...]


def _round_up(v, m):
    return -(-v // m) * m


def _sublanes_for(dtype):
    # f32 -> 8, bf16/f16 -> 16, int8/fp8 -> 32 (packed dtypes pack along sublanes)
    itemsize = jnp.dtype(dtype).itemsize
    return 8 * max(1, 4 // itemsize)


def _num_tensorcores():
    # Best-effort: 2 TensorCores per chip only on v7x; 1 on v5e/v6e.
    try:
        kind = jax.devices()[0].device_kind.lower()
        if "v7" in kind:
            return 2
    except Exception:
        pass
    return 1


def identity_forward(x):
    """nn.Identity.forward: return x unchanged (no kernel, no HBM traffic)."""
    return x


def identity_copy(x):
    """Materialize a fresh copy of x via an optimized Pallas copy kernel."""
    n = x.size
    if n == 0:
        return x
    orig_shape = x.shape
    dtype = x.dtype
    itemsize = jnp.dtype(dtype).itemsize
    sublanes = _sublanes_for(dtype)

    flat = x.reshape(-1)

    # Widest lane-dense last dim that divides n exactly -> no padding pass.
    width = None
    for w in (4096, 2048, 1024, 512, 256, _LANES):
        if n % w == 0:
            width = w
            break

    padded = False
    if width is None:
        # Irregular size: pad once to a multiple of 128 lanes (rare slow path).
        width = _LANES
        rows = -(-n // width)
        flat = jnp.pad(flat, (0, rows * width - n))
        padded = True
    else:
        rows = n // width

    slab = flat.reshape(rows, width)

    # Block sizing (~4 MiB, sublane-aligned).
    row_bytes = width * itemsize
    target_rows = max(sublanes,
                      (_TARGET_BLOCK_BYTES // row_bytes) // sublanes * sublanes)

    ncores = _num_tensorcores()
    if rows <= target_rows and (ncores < 2 or rows < 2 * sublanes):
        # Single full-extent block (legal even if rows is not a multiple of 8).
        block_rows = rows
    elif ncores == 2:
        # v7x: even number of >=2 blocks so both TensorCores get equal ranges.
        steps = max(2, pl.cdiv(rows, target_rows))
        if steps % 2:
            steps += 1
        block_rows = max(sublanes, _round_up(-(-rows // steps), sublanes))
    else:
        # Single-TC chip with rows > target: tile at the target block size.
        block_rows = target_rows

    grid_steps = pl.cdiv(rows, block_rows)
    block_bytes = block_rows * width * itemsize
    # 2 buffers x (in + out) x block, plus 1 MiB headroom.
    vmem_limit = 4 * block_bytes + (1 << 20)

    out_slab = pl.pallas_call(
        _copy_kernel,
        out_shape=jax.ShapeDtypeStruct((rows, width), dtype),
        grid_spec=pltpu.PrefetchScalarGridSpec(
            num_scalar_prefetch=0,
            grid=(grid_steps,),
            in_specs=[pl.BlockSpec((block_rows, width), lambda i: (i, 0))],
            out_specs=pl.BlockSpec((block_rows, width), lambda i: (i, 0)),
        ),
        compiler_params=pltpu.CompilerParams(
            dimension_semantics=("parallel",),
            vmem_limit_bytes=int(vmem_limit),
        ),
        cost_estimate=pl.CostEstimate(
            flops=0,
            transcendentals=0,
            bytes_accessed=2 * rows * width * itemsize),
    )(slab)

    if padded:
        return out_slab.reshape(-1)[:n].reshape(orig_shape)
    return out_slab.reshape(orig_shape)


if __name__ == "__main__":
    key = jax.random.PRNGKey(0)
    x = jax.random.normal(key, (2, 4, 16, 16), jnp.float32)

    # Optimal Identity: no kernel at all, just return x.
    y_fast = identity_forward(x)
    assert y_fast is x

    # Exercise the Pallas copy kernel once (distinct output buffer case).
    y_copy = jax.block_until_ready(identity_copy(x))
    assert y_copy.shape == x.shape
    assert y_copy.dtype == x.dtype
    assert bool(jnp.all(y_copy == x)), "Identity copy kernel output mismatch"

    print("KERNEL_OK")
</pallas_src>

<mosaic_0001>
module attributes {stable_mosaic.version = 11 : i64} {
  func.func @_copy_kernel(%arg0: i32, %arg1: memref<1x2048xf32, #tpu.memory_space<vmem>>, %arg2: memref<1x2048xf32, #tpu.memory_space<vmem>>) attributes {dimension_semantics = [#tpu.dimension_semantics<parallel>], iteration_bounds = array<i64: 1>, scalar_prefetch = 0 : i64, scratch_operands = 0 : i64, tpu.core_type = #tpu.core_type<tc>, window_params = [{transform_indices = @transform_0, window_bounds = array<i64: 1, 2048>}, {transform_indices = @transform_1, window_bounds = array<i64: 1, 2048>}]} {
    %c0 = arith.constant 0 : index
    %c0_0 = arith.constant 0 : index
    %0 = vector.load %arg1[%c0, %c0_0] : memref<1x2048xf32, #tpu.memory_space<vmem>>, vector<1x2048xf32>
    %c0_1 = arith.constant 0 : index
    %c0_2 = arith.constant 0 : index
    %1 = vector.load %arg2[%c0_1, %c0_2] : memref<1x2048xf32, #tpu.memory_space<vmem>>, vector<1x2048xf32>
    tpu.vector_store %arg2[%c0_1, %c0_2], %0 {strides = array<i32>} : memref<1x2048xf32, #tpu.memory_space<vmem>>, vector<1x2048xf32>,
    return
  }
  func.func @transform_0(%arg0: i32) -> (i32, i32) {
    %c0_i32 = arith.constant 0 : i32
    %c0_i32_0 = arith.constant 0 : i32
    return %arg0, %c0_i32 : i32, i32
  }
  func.func @transform_1(%arg0: i32) -> (i32, i32) {
    %c0_i32 = arith.constant 0 : i32
    %c0_i32_0 = arith.constant 0 : i32
    return %arg0, %c0_i32 : i32, i32
  }
}

</mosaic_0001>

<llo_original>
// kernel: tpu_custom_call.1
$region0: #{tpu_custom_call.1}
  #allocation0 [shape = 'u32[]', space=smem, size = 0x4, offset = 0x4, fixed_abs, tag = 'smem constant byte address 0x4 - core index']
  #allocation1 [shape = 'u32[144,128]{1,0:T(1,128)}', space=vmem, size = 0x12000, scoped, tag = 'internal scratch']
  %s0 = inlined_call_operand.hbm [shape: f32[1,2048], index: 0, kind: input, shape index: {}]
  %s1 = inlined_call_operand.hbm [shape: f32[1,2048], index: 1, kind: output, shape index: {}]
  %s2 = sld [smem:[#allocation0]]
  $region18: #{tpu_custom_call.1} parent=0
    _
  %s4 = ssub.s32 1, %s2
  %s5 = scalar_select 0, %s4, %s2
  $region1: #{tpu_custom_call.1} parent=0
    #allocation2 [shape = 'u8[8192]{0}', space=vmem, size = 0x2000, scoped, tag = 'input window, operand 0, single buffered']
    #allocation3 [shape = 's32[1]{0}', space=sflag, size = 0x4, scoped, tag = 'scoped memory for tpu_custom_call.1']
    #allocation4 [shape = 's32[1]{0}', space=sflag, size = 0x4, scoped, tag = 'scoped memory for tpu_custom_call.1']
    #allocation5 [shape = 'u8[8192]{0}', space=vmem, size = 0x2000, scoped, tag = 'output window, operand 0, single buffered']
    %6 = vsyncpa [#allocation3], 0
    %7 = vsyncpa [#allocation4], 0
    // Predicated region
    $region2: #{tpu_custom_call.1} parent=1 // pred_check
      _
    $region3: #{tpu_custom_call.1} parent=1 // pred_check_branch
      %9 = sbr.rel (0) target = $region5
    $region4: #{tpu_custom_call.1} parent=1 // pred_region
      %s11 = ssub.s32 256, 256
      %12 = vsyncadd [#allocation3], %s11
      %s14 = sshll.u32 [#allocation2], 4
      %s15 = int_to_ptr.vmem [resolvable:$true] %s14
      %17 = dma.hbm_to_vmem [thread:$0]  %s0, 256, %s15, [#allocation3]
    $region5: #{tpu_custom_call.1} parent=1 // pred_fallthru
      _
    // Predicated region
    $region6: #{tpu_custom_call.1} parent=1 // pred_check
      _
    $region7: #{tpu_custom_call.1} parent=1 // pred_check_branch
      %19 = sbr.rel (0) target = $region9
    $region8: #{tpu_custom_call.1} parent=1 // pred_region
      %20 = dma.done [#allocation3], 256
    $region9: #{tpu_custom_call.1} parent=1 // pred_fallthru
      _
    %v21 = vld [vmem:[#allocation2] sm:$0xff]
    %v22 = vld [vmem:[#allocation2 + $0x8] sm:$0xff]
    %23 = vst [vmem:[#allocation5] sm:$0xff] %v21
    %24 = vst [vmem:[#allocation5 + $0x8] sm:$0xff] %v22
    // Predicated region
    $region10: #{tpu_custom_call.1} parent=1 // pred_check
      _
    $region11: #{tpu_custom_call.1} parent=1 // pred_check_branch
      %26 = sbr.rel (0) target = $region13
    $region12: #{tpu_custom_call.1} parent=1 // pred_region
      %s28 = ssub.s32 256, 256
      %29 = vsyncadd [#allocation4], %s28
      %s31 = sshll.u32 [#allocation5], 4
      %s32 = int_to_ptr.vmem [resolvable:$true] %s31
      %34 = dma.vmem_to_hbm [thread:$0]  %s32, 256, %s1, [#allocation4]
    $region13: #{tpu_custom_call.1} parent=1 // pred_fallthru
      _
    // Predicated region
    $region14: #{tpu_custom_call.1} parent=1 // pred_check
      _
    $region15: #{tpu_custom_call.1} parent=1 // pred_check_branch
      %36 = sbr.rel (0) target = $region17
    $region16: #{tpu_custom_call.1} parent=1 // pred_region
      %37 = dma.done [#allocation4], 256
    $region17: #{tpu_custom_call.1} parent=1 // pred_fallthru
      _
    %38 = vsyncpa [#allocation3], 1
    %39 = vsyncpa [#allocation4], 1

</llo_original>
